<compile_context>
chip_gen: v7x
topology: tpu7x:2x2x1
jax: 0.10.0
libtpu: 0.0.40
codegen_flags: <defaults>
</compile_context>

<pallas_src>
import jax
import jax.numpy as jnp
from jax.experimental import pallas as pl
from jax.experimental.pallas import tpu as pltpu


# ----------------------------------------------------------------------------- kernel
def _make_fused_kernel(num_layers: int, num_etypes: int, apply_relu: bool):
    """Kernel over L fused HeteroGraphConv(GraphConv) layers, etype loop collapsed into stacked matmuls.

    refs = [x, (a_hcat_l, w_pad_l, b_sum_l) * L, out]
      x        [N, F0_pad]            compute dtype (f32 or bf16)
      a_hcat_l [N, E*N]               compute dtype (A_norm of all etypes concatenated along source axis)
      w_pad_l  [E, Fin_pad, Fout_pad] compute dtype
      b_sum_l  [1, Fout_pad]          f32          (sum over etypes, hoisted out of the aggregation)
      out      [N, Fout_pad_last]     f32
    """

    def kernel(*refs):
        x_ref = refs[0]
        o_ref = refs[-1]
        cdt = x_ref.dtype                      # MXU input dtype (bf16 on v6e/v7x, f32 otherwise)

        h = x_ref[...]                         # [N, F_pad] compute dtype
        h32 = None
        for l in range(num_layers):            # static Python unroll over layers (L is tiny)
            a_ref, w_ref, b_ref = refs[1 + 3 * l: 4 + 3 * l]

            # Per-etype feature transform X @ W_e, stacked vertically -> [E*N_src, F_out_pad].
            # (E static, tiny -> unrolled; each dot hits the MXU with f32 accumulation.)
            xw = jnp.concatenate(
                [jnp.dot(h, w_ref[e], preferred_element_type=jnp.float32).astype(cdt)
                 for e in range(num_etypes)],
                axis=0)

            # Neighbor aggregation + 'sum' over etypes in ONE matmul:
            #   [N_dst, E*N_src] @ [E*N_src, F_out_pad]
            h32 = jnp.dot(a_ref[...], xw, preferred_element_type=jnp.float32)
            h32 = h32 + b_ref[...]             # hoisted sum_e(b_e), f32 broadcast add
            if apply_relu:                      # activation=F.relu from the architecture args
                h32 = jnp.maximum(h32, 0.0)
            h = h32.astype(cdt)                 # feed next layer's MXU in compute dtype

        o_ref[...] = h32.astype(o_ref.dtype)

    return kernel


def _round_up(x: int, m: int) -> int:
    return ((x + m - 1) // m) * m


def fused_hetero_gcn_forward(blocks, x, params, *, apply_relu=True,
                             compute_dtype=jnp.float32, lane_multiple=128):
    """All GNN layers fused into one pallas_call.

    blocks: list of [E, N, N] normalized dense adjacencies (one per layer / MFG block)
    x:      [N, F_in] f32 node features
    params: list of (W [E, F_in, F_out], b [E, 1, F_out]) per layer
    returns [N, F_out_last] f32
    """
    N, f_in0 = x.shape
    E = blocks[0].shape[0]
    L = len(blocks)
    assert len(params) == L

    # Lane-dense padding of the feature dims (multiple of 128 lanes).
    in_pad = _round_up(f_in0, lane_multiple)
    x_pad = jnp.zeros((N, in_pad), jnp.float32).at[:, :f_in0].set(x).astype(compute_dtype)

    flat_inputs = [x_pad]
    cur_in, cur_in_pad = f_in0, in_pad
    for l in range(L):
        w, b = params[l]
        f_in, f_out = int(w.shape[1]), int(w.shape[2])
        assert f_in == cur_in, "layer feature dims must chain"
        out_pad = _round_up(f_out, lane_multiple)

        # Zero-pad weights to (padded_in, padded_out); padded rows/cols contribute exact zeros.
        w_pad = jnp.zeros((E, cur_in_pad, out_pad), jnp.float32).at[:, :f_in, :f_out].set(w)
        # Hoisted bias: sum over etype modules (HeteroGraphConv aggregate='sum').
        b_sum = jnp.zeros((1, out_pad), jnp.float32).at[:, :f_out].set(b.sum(axis=0).reshape(1, f_out))
        # Concatenate per-etype adjacencies along the source axis: A_hcat[d, e*N + s] = A_norm[e, d, s].
        a_hcat = blocks[l].transpose(1, 0, 2).reshape(N, E * N)

        flat_inputs += [a_hcat.astype(compute_dtype),
                        w_pad.astype(compute_dtype),
                        b_sum]                                   # bias stays f32 (VPU add in f32)
        cur_in, cur_in_pad = f_out, out_pad

    out_pad_last = cur_in_pad
    f_out_last = cur_in

    vmem = pl.BlockSpec(memory_space=pltpu.MemorySpace.VMEM)     # whole (tiny) arrays VMEM-resident, no grid
    out = pl.pallas_call(
        _make_fused_kernel(L, E, apply_relu),
        out_shape=jax.ShapeDtypeStruct((N, out_pad_last), jnp.float32),
        in_specs=[vmem] * len(flat_inputs),
        out_specs=vmem,
    )(*flat_inputs)

    return out[:, :f_out_last]


# ----------------------------------------------------------------------------- glue (plain JAX)
def normalize_adjacency(adj):
    """GraphConv norm='both':  D_dst^{-1/2} A D_src^{-1/2}, per edge type (degrees clamped at 1)."""
    deg_dst = jnp.maximum(adj.sum(axis=2, keepdims=True), 1.0)   # in-degree of dst
    deg_src = jnp.maximum(adj.sum(axis=1, keepdims=True), 1.0)   # out-degree of src
    return adj / jnp.sqrt(deg_dst) / jnp.sqrt(deg_src)


def gnn_layer_forward(blocks, x_dict, params, *, apply_relu=True, compute_dtype=jnp.float32):
    """Mirrors GNNLayer.forward: all (layer, block) pairs applied to x (dict keyed by node type)."""
    x = x_dict['node']
    out = fused_hetero_gcn_forward(blocks, x, params, apply_relu=apply_relu,
                                   compute_dtype=compute_dtype)
    # cfg_model.name != 'Graph Attention Networks' -> no multihead merge branch.
    # TODO(synk): GAT multihead concat/mean merge path not instantiated (config-dependent).
    return {'node': out}


def reference_forward(blocks, x_dict, params, *, apply_relu=True):
    x = x_dict['node']
    for a_norm, (w, b) in zip(blocks, params):
        out = jnp.einsum('ens,sf,efo->no', a_norm, x, w) + b.sum(axis=0)
        x = jnp.maximum(out, 0.0) if apply_relu else out
    return {'node': x}


# ----------------------------------------------------------------------------- main
if __name__ == "__main__":
    key = jax.random.PRNGKey(0)
    N = 32          # nodes (single node type)
    F_IN = 32       # input feature dim
    F_OUT = 32      # output feature dim (same for both layers)
    E = 3           # number of edge types
    L = 2           # number of GNN layers (== len(blocks))

    keys = jax.random.split(key, 2 + 2 * L + L)

    # Node features.
    x = jax.random.normal(keys[0], (N, F_IN), dtype=jnp.float32)

    # One random binary adjacency per etype per block, then GraphConv 'both' normalization.
    blocks = []
    for l in range(L):
        raw = (jax.random.uniform(keys[1 + l], (E, N, N)) < 0.15).astype(jnp.float32)
        blocks.append(normalize_adjacency(raw))

    # Deterministic Glorot-style init for per-etype GraphConv weights + zero bias.
    params = []
    dims = [F_IN] + [F_OUT] * L
    for l in range(L):
        fan_in, fan_out = dims[l], dims[l + 1]
        scale = jnp.sqrt(6.0 / (fan_in + fan_out))
        w = jax.random.uniform(keys[1 + L + l], (E, fan_in, fan_out),
                               minval=-scale, maxval=scale, dtype=jnp.float32)
        b = jnp.zeros((E, 1, fan_out), dtype=jnp.float32)
        params.append((w, b))

    ref = reference_forward(blocks, {'node': x}, params, apply_relu=True)['node']

    # f32 path (exact semantics; safe on all generations) -- strict check.
    out_f32 = gnn_layer_forward(blocks, {'node': x}, params,
                                apply_relu=True, compute_dtype=jnp.float32)['node']
    out_f32 = jax.block_until_ready(out_f32)
    assert out_f32.shape == (N, F_OUT)
    assert jnp.allclose(out_f32, ref, atol=1e-4, rtol=1e-4), "Pallas kernel (f32) mismatch vs JAX reference"

    # bf16 MXU-input path (v6e/v7x throughput lever, f32 accumulation) -- loose tolerance.
    out_bf16 = gnn_layer_forward(blocks, {'node': x}, params,
                                 apply_relu=True, compute_dtype=jnp.bfloat16)['node']
    out_bf16 = jax.block_until_ready(out_bf16)
    assert out_bf16.shape == (N, F_OUT)
    assert jnp.allclose(out_bf16, ref, atol=1e-1, rtol=1e-1), "Pallas kernel (bf16) mismatch vs JAX reference"

    print("KERNEL_OK")
</pallas_src>

<mosaic_0001>
module attributes {stable_mosaic.version = 11 : i64} {
  func.func @kernel(%arg0: memref<32x128xf32, #tpu.memory_space<vmem>>, %arg1: memref<32x96xf32, #tpu.memory_space<vmem>>, %arg2: memref<3x128x128xf32, #tpu.memory_space<vmem>>, %arg3: memref<1x128xf32, #tpu.memory_space<vmem>>, %arg4: memref<32x96xf32, #tpu.memory_space<vmem>>, %arg5: memref<3x128x128xf32, #tpu.memory_space<vmem>>, %arg6: memref<1x128xf32, #tpu.memory_space<vmem>>, %arg7: memref<32x128xf32, #tpu.memory_space<vmem>>) attributes {dimension_semantics = [], scalar_prefetch = 0 : i64, scratch_operands = 0 : i64, tpu.core_type = #tpu.core_type<tc>} {
    %c0 = arith.constant 0 : index
    %c0_0 = arith.constant 0 : index
    %0 = vector.load %arg0[%c0, %c0_0] : memref<32x128xf32, #tpu.memory_space<vmem>>, vector<32x128xf32>
    %c0_1 = arith.constant 0 : index
    %c0_2 = arith.constant 0 : index
    %c0_3 = arith.constant 0 : index
    %1 = vector.load %arg2[%c0_1, %c0_2, %c0_3] : memref<3x128x128xf32, #tpu.memory_space<vmem>>, vector<1x128x128xf32>
    %2 = vector.shape_cast %1 : vector<1x128x128xf32> to vector<128x128xf32>
    %cst = arith.constant dense<0.000000e+00> : vector<32x128xf32>
    %3 = tpu.matmul %0, %2, %cst {dimension_numbers = #tpu.dot_dimension_numbers<[1], [0], [0], [1], [0, 0, 1, 1], [], []>} : vector<32x128xf32>, vector<128x128xf32>, vector<32x128xf32> -> vector<32x128xf32>
    %c1 = arith.constant 1 : index
    %c0_4 = arith.constant 0 : index
    %c0_5 = arith.constant 0 : index
    %4 = vector.load %arg2[%c1, %c0_4, %c0_5] : memref<3x128x128xf32, #tpu.memory_space<vmem>>, vector<1x128x128xf32>
    %5 = vector.shape_cast %4 : vector<1x128x128xf32> to vector<128x128xf32>
    %cst_6 = arith.constant dense<0.000000e+00> : vector<32x128xf32>
    %6 = tpu.matmul %0, %5, %cst_6 {dimension_numbers = #tpu.dot_dimension_numbers<[1], [0], [0], [1], [0, 0, 1, 1], [], []>} : vector<32x128xf32>, vector<128x128xf32>, vector<32x128xf32> -> vector<32x128xf32>
    %c2 = arith.constant 2 : index
    %c0_7 = arith.constant 0 : index
    %c0_8 = arith.constant 0 : index
    %7 = vector.load %arg2[%c2, %c0_7, %c0_8] : memref<3x128x128xf32, #tpu.memory_space<vmem>>, vector<1x128x128xf32>
    %8 = vector.shape_cast %7 : vector<1x128x128xf32> to vector<128x128xf32>
    %cst_9 = arith.constant dense<0.000000e+00> : vector<32x128xf32>
    %9 = tpu.matmul %0, %8, %cst_9 {dimension_numbers = #tpu.dot_dimension_numbers<[1], [0], [0], [1], [0, 0, 1, 1], [], []>} : vector<32x128xf32>, vector<128x128xf32>, vector<32x128xf32> -> vector<32x128xf32>
    %10 = tpu.concatenate %3, %6, %9 in 0 : vector<32x128xf32>, vector<32x128xf32>, vector<32x128xf32> -> vector<96x128xf32>
    %c0_10 = arith.constant 0 : index
    %c0_11 = arith.constant 0 : index
    %11 = vector.load %arg1[%c0_10, %c0_11] : memref<32x96xf32, #tpu.memory_space<vmem>>, vector<32x96xf32>
    %cst_12 = arith.constant dense<0.000000e+00> : vector<32x128xf32>
    %12 = tpu.matmul %11, %10, %cst_12 {dimension_numbers = #tpu.dot_dimension_numbers<[1], [0], [0], [1], [0, 0, 1, 1], [], []>} : vector<32x96xf32>, vector<96x128xf32>, vector<32x128xf32> -> vector<32x128xf32>
    %c0_13 = arith.constant 0 : index
    %c0_14 = arith.constant 0 : index
    %13 = vector.load %arg3[%c0_13, %c0_14] : memref<1x128xf32, #tpu.memory_space<vmem>>, vector<1x128xf32>
    %14 = vector.broadcast %13 : vector<1x128xf32> to vector<32x128xf32>
    %15 = arith.addf %12, %14 : vector<32x128xf32>
    %cst_15 = arith.constant 0.000000e+00 : f32
    %16 = vector.broadcast %cst_15 : f32 to vector<32x128xf32>
    %17 = arith.maximumf %15, %16 : vector<32x128xf32>
    %c0_16 = arith.constant 0 : index
    %c0_17 = arith.constant 0 : index
    %c0_18 = arith.constant 0 : index
    %18 = vector.load %arg5[%c0_16, %c0_17, %c0_18] : memref<3x128x128xf32, #tpu.memory_space<vmem>>, vector<1x128x128xf32>
    %19 = vector.shape_cast %18 : vector<1x128x128xf32> to vector<128x128xf32>
    %cst_19 = arith.constant dense<0.000000e+00> : vector<32x128xf32>
    %20 = tpu.matmul %17, %19, %cst_19 {dimension_numbers = #tpu.dot_dimension_numbers<[1], [0], [0], [1], [0, 0, 1, 1], [], []>} : vector<32x128xf32>, vector<128x128xf32>, vector<32x128xf32> -> vector<32x128xf32>
    %c1_20 = arith.constant 1 : index
    %c0_21 = arith.constant 0 : index
    %c0_22 = arith.constant 0 : index
    %21 = vector.load %arg5[%c1_20, %c0_21, %c0_22] : memref<3x128x128xf32, #tpu.memory_space<vmem>>, vector<1x128x128xf32>
    %22 = vector.shape_cast %21 : vector<1x128x128xf32> to vector<128x128xf32>
    %cst_23 = arith.constant dense<0.000000e+00> : vector<32x128xf32>
    %23 = tpu.matmul %17, %22, %cst_23 {dimension_numbers = #tpu.dot_dimension_numbers<[1], [0], [0], [1], [0, 0, 1, 1], [], []>} : vector<32x128xf32>, vector<128x128xf32>, vector<32x128xf32> -> vector<32x128xf32>
    %c2_24 = arith.constant 2 : index
    %c0_25 = arith.constant 0 : index
    %c0_26 = arith.constant 0 : index
    %24 = vector.load %arg5[%c2_24, %c0_25, %c0_26] : memref<3x128x128xf32, #tpu.memory_space<vmem>>, vector<1x128x128xf32>
    %25 = vector.shape_cast %24 : vector<1x128x128xf32> to vector<128x128xf32>
    %cst_27 = arith.constant dense<0.000000e+00> : vector<32x128xf32>
    %26 = tpu.matmul %17, %25, %cst_27 {dimension_numbers = #tpu.dot_dimension_numbers<[1], [0], [0], [1], [0, 0, 1, 1], [], []>} : vector<32x128xf32>, vector<128x128xf32>, vector<32x128xf32> -> vector<32x128xf32>
    %27 = tpu.concatenate %20, %23, %26 in 0 : vector<32x128xf32>, vector<32x128xf32>, vector<32x128xf32> -> vector<96x128xf32>
    %c0_28 = arith.constant 0 : index
    %c0_29 = arith.constant 0 : index
    %28 = vector.load %arg4[%c0_28, %c0_29] : memref<32x96xf32, #tpu.memory_space<vmem>>, vector<32x96xf32>
    %cst_30 = arith.constant dense<0.000000e+00> : vector<32x128xf32>
    %29 = tpu.matmul %28, %27, %cst_30 {dimension_numbers = #tpu.dot_dimension_numbers<[1], [0], [0], [1], [0, 0, 1, 1], [], []>} : vector<32x96xf32>, vector<96x128xf32>, vector<32x128xf32> -> vector<32x128xf32>
    %c0_31 = arith.constant 0 : index
    %c0_32 = arith.constant 0 : index
    %30 = vector.load %arg6[%c0_31, %c0_32] : memref<1x128xf32, #tpu.memory_space<vmem>>, vector<1x128xf32>
    %31 = vector.broadcast %30 : vector<1x128xf32> to vector<32x128xf32>
    %32 = arith.addf %29, %31 : vector<32x128xf32>
    %cst_33 = arith.constant 0.000000e+00 : f32
    %33 = vector.broadcast %cst_33 : f32 to vector<32x128xf32>
    %34 = arith.maximumf %32, %33 : vector<32x128xf32>
    %c0_34 = arith.constant 0 : index
    %c0_35 = arith.constant 0 : index
    %35 = vector.load %arg7[%c0_34, %c0_35] : memref<32x128xf32, #tpu.memory_space<vmem>>, vector<32x128xf32>
    tpu.vector_store %arg7[%c0_34, %c0_35], %34 {strides = array<i32>} : memref<32x128xf32, #tpu.memory_space<vmem>>, vector<32x128xf32>,
    return
  }
}

</mosaic_0001>

<llo_original>
// kernel: tpu_custom_call.1
$region0: #{tpu_custom_call.1}
  #allocation0 [shape = 'u32[]', space=smem, size = 0x4, offset = 0x4, fixed_abs, tag = 'smem constant byte address 0x4 - core index']
  #allocation1 [shape = 'u32[144,128]{1,0:T(1,128)}', space=vmem, size = 0x12000, scoped, tag = 'internal scratch']
  %s0 = inlined_call_operand.hbm [shape: f32[32,128], index: 0, kind: input, shape index: {}]
  %s1 = inlined_call_operand.hbm [shape: f32[32,96], index: 1, kind: input, shape index: {}]
  %s2 = inlined_call_operand.hbm [shape: f32[3,128,128], index: 2, kind: input, shape index: {}]
  %s3 = inlined_call_operand.vmem [shape: f32[1,128], index: 3, kind: input, shape index: {}]
  %s4 = inlined_call_operand.hbm [shape: f32[32,96], index: 4, kind: input, shape index: {}]
  %s5 = inlined_call_operand.hbm [shape: f32[3,128,128], index: 5, kind: input, shape index: {}]
  %s6 = inlined_call_operand.vmem [shape: f32[1,128], index: 6, kind: input, shape index: {}]
  %s7 = inlined_call_operand.hbm [shape: f32[32,128], index: 7, kind: output, shape index: {}]
  %s8 = sld [smem:[#allocation0]]
  $region58: #{tpu_custom_call.1} parent=0
    _
  %s10 = ssub.s32 1, %s8
  %s11 = scalar_select 0, %s10, %s8
  $region1: #{tpu_custom_call.1} parent=0
    #allocation2 [shape = 'u8[16384]{0}', space=vmem, size = 0x4000, scoped, tag = 'input window, operand 0, single buffered']
    #allocation3 [shape = 's32[1]{0}', space=sflag, size = 0x4, scoped, tag = 'scoped memory for tpu_custom_call.1']
    #allocation4 [shape = 's32[1]{0}', space=sflag, size = 0x4, scoped, tag = 'scoped memory for tpu_custom_call.1']
    #allocation5 [shape = 'u8[16384]{0}', space=vmem, size = 0x4000, scoped, tag = 'input window, operand 1, single buffered']
    #allocation6 [shape = 's32[1]{0}', space=sflag, size = 0x4, scoped, tag = 'scoped memory for tpu_custom_call.1']
    #allocation7 [shape = 'u8[196608]{0}', space=vmem, size = 0x30000, scoped, tag = 'input window, operand 2, single buffered']
    #allocation8 [shape = 'u8[16384]{0}', space=vmem, size = 0x4000, scoped, tag = 'input window, operand 4, single buffered']
    #allocation9 [shape = 's32[1]{0}', space=sflag, size = 0x4, scoped, tag = 'scoped memory for tpu_custom_call.1']
    #allocation10 [shape = 'u8[196608]{0}', space=vmem, size = 0x30000, scoped, tag = 'input window, operand 5, single buffered']
    #allocation11 [shape = 'u8[16384]{0}', space=vmem, size = 0x4000, scoped, tag = 'output window, operand 0, single buffered']
    %12 = vsyncpa [#allocation3], 0
    %13 = vsyncpa [#allocation6], 0
    %14 = vsyncpa [#allocation9], 0
    %15 = vsyncpa [#allocation4], 0
    // Predicated region
    $region2: #{tpu_custom_call.1} parent=1 // pred_check
      _
    $region3: #{tpu_custom_call.1} parent=1 // pred_check_branch
      %17 = sbr.rel (0) target = $region5
    $region4: #{tpu_custom_call.1} parent=1 // pred_region
      %s19 = ssub.s32 512, 512
      %20 = vsyncadd [#allocation3], %s19
      %s21 = sshll.u32 [#allocation2], 4
      %s22 = int_to_ptr.vmem [resolvable:$true] %s21
      %27 = dma.hbm_to_vmem [thread:$0]  %s0, 512, %s22, [#allocation3], 128, 128, 8
    $region5: #{tpu_custom_call.1} parent=1 // pred_fallthru
      _
    // Predicated region
    $region6: #{tpu_custom_call.1} parent=1 // pred_check
      _
    $region7: #{tpu_custom_call.1} parent=1 // pred_check_branch
      %29 = sbr.rel (0) target = $region9
    $region8: #{tpu_custom_call.1} parent=1 // pred_region
      %s31 = ssub.s32 512, 512
      %32 = vsyncadd [#allocation6], %s31
      %s33 = sshll.u32 [#allocation5], 4
      %s34 = int_to_ptr.vmem [resolvable:$true] %s33
      %39 = dma.hbm_to_vmem [thread:$0]  %s1, 512, %s34, [#allocation6], 128, 128, 8
    $region9: #{tpu_custom_call.1} parent=1 // pred_fallthru
      _
    // Predicated region
    $region10: #{tpu_custom_call.1} parent=1 // pred_check
      _
    $region11: #{tpu_custom_call.1} parent=1 // pred_check_branch
      %41 = sbr.rel (0) target = $region13
    $region12: #{tpu_custom_call.1} parent=1 // pred_region
      %s43 = ssub.s32 6144, 6144
      %44 = vsyncadd [#allocation6], %s43
      %s45 = sshll.u32 [#allocation7], 4
      %s46 = int_to_ptr.vmem [resolvable:$true] %s45
      %51 = dma.hbm_to_vmem [thread:$0]  %s2, 6144, %s46, [#allocation6], 128, 128, 8
    $region13: #{tpu_custom_call.1} parent=1 // pred_fallthru
      _
    // Predicated region
    $region14: #{tpu_custom_call.1} parent=1 // pred_check
      _
    $region15: #{tpu_custom_call.1} parent=1 // pred_check_branch
      %53 = sbr.rel (0) target = $region17
    $region16: #{tpu_custom_call.1} parent=1 // pred_region
      _
    $region17: #{tpu_custom_call.1} parent=1 // pred_fallthru
      _
    // Predicated region
    $region18: #{tpu_custom_call.1} parent=1 // pred_check
      _
    $region19: #{tpu_custom_call.1} parent=1 // pred_check_branch
      %55 = sbr.rel (0) target = $region21
    $region20: #{tpu_custom_call.1} parent=1 // pred_region
      %s57 = ssub.s32 512, 512
      %58 = vsyncadd [#allocation9], %s57
      %s59 = sshll.u32 [#allocation8], 4
      %s60 = int_to_ptr.vmem [resolvable:$true] %s59
      %65 = dma.hbm_to_vmem [thread:$0]  %s4, 512, %s60, [#allocation9], 128, 128, 8
    $region21: #{tpu_custom_call.1} parent=1 // pred_fallthru
      _
    // Predicated region
    $region22: #{tpu_custom_call.1} parent=1 // pred_check
      _
    $region23: #{tpu_custom_call.1} parent=1 // pred_check_branch
      %67 = sbr.rel (0) target = $region25
    $region24: #{tpu_custom_call.1} parent=1 // pred_region
      %s69 = ssub.s32 6144, 6144
      %70 = vsyncadd [#allocation9], %s69
      %s71 = sshll.u32 [#allocation10], 4
      %s72 = int_to_ptr.vmem [resolvable:$true] %s71
      %77 = dma.hbm_to_vmem [thread:$0]  %s5, 6144, %s72, [#allocation9], 128, 128, 8
    $region25: #{tpu_custom_call.1} parent=1 // pred_fallthru
      _
    // Predicated region
    $region26: #{tpu_custom_call.1} parent=1 // pred_check
      _
    $region27: #{tpu_custom_call.1} parent=1 // pred_check_branch
      %79 = sbr.rel (0) target = $region29
    $region28: #{tpu_custom_call.1} parent=1 // pred_region
      _
    $region29: #{tpu_custom_call.1} parent=1 // pred_fallthru
      _
    // Predicated region
    $region30: #{tpu_custom_call.1} parent=1 // pred_check
      _
    $region31: #{tpu_custom_call.1} parent=1 // pred_check_branch
      %81 = sbr.rel (0) target = $region33
    $region32: #{tpu_custom_call.1} parent=1 // pred_region
      %82 = dma.done [#allocation3], 512
    $region33: #{tpu_custom_call.1} parent=1 // pred_fallthru
      _
    // Predicated region
    $region34: #{tpu_custom_call.1} parent=1 // pred_check
      _
    $region35: #{tpu_custom_call.1} parent=1 // pred_check_branch
      %84 = sbr.rel (0) target = $region37
    $region36: #{tpu_custom_call.1} parent=1 // pred_region
      %85 = dma.done [#allocation6], 512
    $region37: #{tpu_custom_call.1} parent=1 // pred_fallthru
      _
    // Predicated region
    $region38: #{tpu_custom_call.1} parent=1 // pred_check
      _
    $region39: #{tpu_custom_call.1} parent=1 // pred_check_branch
      %87 = sbr.rel (0) target = $region41
    $region40: #{tpu_custom_call.1} parent=1 // pred_region
      %88 = dma.done [#allocation6], 6144
    $region41: #{tpu_custom_call.1} parent=1 // pred_fallthru
      _
    // Predicated region
    $region42: #{tpu_custom_call.1} parent=1 // pred_check
      _
    $region43: #{tpu_custom_call.1} parent=1 // pred_check_branch
      %90 = sbr.rel (0) target = $region45
    $region44: #{tpu_custom_call.1} parent=1 // pred_region
      %91 = dma.done [#allocation9], 512
    $region45: #{tpu_custom_call.1} parent=1 // pred_fallthru
      _
    // Predicated region
    $region46: #{tpu_custom_call.1} parent=1 // pred_check
      _
    $region47: #{tpu_custom_call.1} parent=1 // pred_check_branch
      %93 = sbr.rel (0) target = $region49
    $region48: #{tpu_custom_call.1} parent=1 // pred_region
      %94 = dma.done [#allocation9], 6144
    $region49: #{tpu_custom_call.1} parent=1 // pred_fallthru
      _
    %v95 = vld [vmem:[#allocation2] sm:$0xff]
    %v96 = vld [vmem:[#allocation2 + $0x8] sm:$0xff]
    %v97 = vld [vmem:[#allocation2 + $0x10] sm:$0xff]
    %v98 = vld [vmem:[#allocation2 + $0x18] sm:$0xff]
    %v99 = vld [vmem:[#allocation7] sm:$0xff]
    %v100 = vld [vmem:[#allocation7 + $0x8] sm:$0xff]
    %v101 = vld [vmem:[#allocation7 + $0x10] sm:$0xff]
    %v102 = vld [vmem:[#allocation7 + $0x18] sm:$0xff]
    %v103 = vld [vmem:[#allocation7 + $0x20] sm:$0xff]
    %v104 = vld [vmem:[#allocation7 + $0x28] sm:$0xff]
    %v105 = vld [vmem:[#allocation7 + $0x30] sm:$0xff]
    %v106 = vld [vmem:[#allocation7 + $0x38] sm:$0xff]
    %v107 = vld [vmem:[#allocation7 + $0x40] sm:$0xff]
    %v108 = vld [vmem:[#allocation7 + $0x48] sm:$0xff]
    %v109 = vld [vmem:[#allocation7 + $0x50] sm:$0xff]
    %v110 = vld [vmem:[#allocation7 + $0x58] sm:$0xff]
    %v111 = vld [vmem:[#allocation7 + $0x60] sm:$0xff]
    %v112 = vld [vmem:[#allocation7 + $0x68] sm:$0xff]
    %v113 = vld [vmem:[#allocation7 + $0x70] sm:$0xff]
    %v114 = vld [vmem:[#allocation7 + $0x78] sm:$0xff]
    %115 = vmatprep.subr.mxu0 0.0
    %116 = vmatpush1.msra.mxu0 %v99
    %117 = vmatprep.subr.mxu0 0.0
    %118 = vmatpush1.msra.mxu0 %v100
    %119 = vmatprep.subr.mxu0 0.0
    %120 = vmatpush1.msra.mxu0 %v101
    %121 = vmatprep.subr.mxu0 0.0
    %122 = vmatpush1.msra.mxu0 %v102
    %123 = vmatprep.subr.mxu0 0.0
    %124 = vmatpush1.msra.mxu0 %v103
    %125 = vmatprep.subr.mxu0 0.0
    %126 = vmatpush1.msra.mxu0 %v104
    %127 = vmatprep.subr.mxu0 0.0
    %128 = vmatpush1.msra.mxu0 %v105
    %129 = vmatprep.subr.mxu0 0.0
    %130 = vmatpush1.msra.mxu0 %v106
    %131 = vmatprep.subr.mxu0 0.0
    %132 = vmatpush1.msra.mxu0 %v107
    %133 = vmatprep.subr.mxu0 0.0
    %134 = vmatpush1.msra.mxu0 %v108
    %135 = vmatprep.subr.mxu0 0.0
    %136 = vmatpush1.msra.mxu0 %v109
    %137 = vmatprep.subr.mxu0 0.0
    %138 = vmatpush1.msra.mxu0 %v110
    %139 = vmatprep.subr.mxu0 0.0
    %140 = vmatpush1.msra.mxu0 %v111
    %141 = vmatprep.subr.mxu0 0.0
    %142 = vmatpush1.msra.mxu0 %v112
    %143 = vmatprep.subr.mxu0 0.0
    %144 = vmatpush1.msra.mxu0 %v113
    %145 = vmatprep.subr.mxu0 0.0
    %146 = vmatpush1.msra.mxu0 %v114
    %147 = vmatprep.subr.mxu0 0.0
    %148 = vmatpush1.msra.mxu0 0.0
    %149 = vmatprep.subr.mxu0 0.0
    %150 = vmatpush1.msra.mxu0 0.0
    %151 = vmatprep.subr.mxu0 0.0
    %152 = vmatpush1.msra.mxu0 0.0
    %153 = vmatprep.subr.mxu0 0.0
    %154 = vmatpush1.msra.mxu0 0.0
    %155 = vmatprep.subr.mxu0 0.0
    %156 = vmatpush1.msra.mxu0 0.0
    %157 = vmatprep.subr.mxu0 0.0
    %158 = vmatpush1.msra.mxu0 0.0
    %159 = vmatprep.subr.mxu0 0.0
    %160 = vmatpush1.msra.mxu0 0.0
    %161 = vmatprep.subr.mxu0 0.0
    %162 = vmatpush1.msra.mxu0 0.0
    %163 = vmatprep.subr.mxu0 0.0
    %164 = vmatpush1.msra.mxu0 0.0
    %165 = vmatprep.subr.mxu0 0.0
    %166 = vmatpush1.msra.mxu0 0.0
    %167 = vmatprep.subr.mxu0 0.0
    %168 = vmatpush1.msra.mxu0 0.0
    %169 = vmatprep.subr.mxu0 0.0
    %170 = vmatpush1.msra.mxu0 0.0
    %171 = vmatprep.subr.mxu0 0.0
    %172 = vmatpush1.msra.mxu0 0.0
    %173 = vmatprep.subr.mxu0 0.0
    %174 = vmatpush1.msra.mxu0 0.0
    %175 = vmatprep.subr.mxu0 0.0
    %176 = vmatpush1.msra.mxu0 0.0
    %177 = vmatprep.subr.mxu0 0.0
    %178 = vmatpush1.msra.mxu0 0.0
    %179 = vmatprep.mubr.f32.mxu0 0.0
    %180 = vmatmul.mubr.f32.gmra.mrb[0].mxu0 %v95
    %v181 = vpop.f32.mrb[0].mxu0
    %v182 = vadd.f32 0.0, %v181
    %v183 = vpop.f32.mrb[0].mxu0
    %184 = vmatprep.mubr.f32.mxu0 0.0
    %185 = vmatmul.mubr.f32.gmra.mrb[0].mxu0 %v96
    %v186 = vpop.f32.mrb[0].mxu0
    %v187 = vadd.f32 0.0, %v186
    %v188 = vpop.f32.mrb[0].mxu0
    %189 = vmatprep.mubr.f32.mxu0 0.0
    %190 = vmatmul.mubr.f32.gmra.mrb[0].mxu0 %v97
    %v191 = vpop.f32.mrb[0].mxu0
    %v192 = vadd.f32 0.0, %v191
    %v193 = vpop.f32.mrb[0].mxu0
    %194 = vmatprep.mubr.f32.mxu0 0.0
    %195 = vmatmul.mubr.f32.gmra.mrb[0].mxu0 %v98
    %v196 = vpop.f32.mrb[0].mxu0
    %v197 = vadd.f32 0.0, %v196
    %v198 = vpop.f32.mrb[0].mxu0
    %199 = vdwg.mxu0
    %s200 = scalar_lea.vmem [#allocation7], 128
    %v201 = vld [vmem:[%s200] sm:$0xff]
    %v202 = vld [vmem:[%s200 + $0x8] sm:$0xff]
    %v203 = vld [vmem:[%s200 + $0x10] sm:$0xff]
    %v204 = vld [vmem:[%s200 + $0x18] sm:$0xff]
    %v205 = vld [vmem:[%s200 + $0x20] sm:$0xff]
    %v206 = vld [vmem:[%s200 + $0x28] sm:$0xff]
    %v207 = vld [vmem:[%s200 + $0x30] sm:$0xff]
    %v208 = vld [vmem:[%s200 + $0x38] sm:$0xff]
    %v209 = vld [vmem:[%s200 + $0x40] sm:$0xff]
    %v210 = vld [vmem:[%s200 + $0x48] sm:$0xff]
    %v211 = vld [vmem:[%s200 + $0x50] sm:$0xff]
    %v212 = vld [vmem:[%s200 + $0x58] sm:$0xff]
    %v213 = vld [vmem:[%s200 + $0x60] sm:$0xff]
    %v214 = vld [vmem:[%s200 + $0x68] sm:$0xff]
    %v215 = vld [vmem:[%s200 + $0x70] sm:$0xff]
    %v216 = vld [vmem:[%s200 + $0x78] sm:$0xff]
    %217 = vmatprep.subr.mxu0 0.0
    %218 = vmatpush1.msra.mxu0 %v201
    %219 = vmatprep.subr.mxu0 0.0
    %220 = vmatpush1.msra.mxu0 %v202
    %221 = vmatprep.subr.mxu0 0.0
    %222 = vmatpush1.msra.mxu0 %v203
    %223 = vmatprep.subr.mxu0 0.0
    %224 = vmatpush1.msra.mxu0 %v204
    %225 = vmatprep.subr.mxu0 0.0
    %226 = vmatpush1.msra.mxu0 %v205
    %227 = vmatprep.subr.mxu0 0.0
    %228 = vmatpush1.msra.mxu0 %v206
    %229 = vmatprep.subr.mxu0 0.0
    %230 = vmatpush1.msra.mxu0 %v207
    %231 = vmatprep.subr.mxu0 0.0
    %232 = vmatpush1.msra.mxu0 %v208
    %233 = vmatprep.subr.mxu0 0.0
    %234 = vmatpush1.msra.mxu0 %v209
    %235 = vmatprep.subr.mxu0 0.0
    %236 = vmatpush1.msra.mxu0 %v210
    %237 = vmatprep.subr.mxu0 0.0
    %238 = vmatpush1.msra.mxu0 %v211
    %239 = vmatprep.subr.mxu0 0.0
    %240 = vmatpush1.msra.mxu0 %v212
    %241 = vmatprep.subr.mxu0 0.0
    %242 = vmatpush1.msra.mxu0 %v213
    %243 = vmatprep.subr.mxu0 0.0
    %244 = vmatpush1.msra.mxu0 %v214
    %245 = vmatprep.subr.mxu0 0.0
    %246 = vmatpush1.msra.mxu0 %v215
    %247 = vmatprep.subr.mxu0 0.0
    %248 = vmatpush1.msra.mxu0 %v216
    %249 = vmatprep.subr.mxu0 0.0
    %250 = vmatpush1.msra.mxu0 0.0
    %251 = vmatprep.subr.mxu0 0.0
    %252 = vmatpush1.msra.mxu0 0.0
    %253 = vmatprep.subr.mxu0 0.0
    %254 = vmatpush1.msra.mxu0 0.0
    %255 = vmatprep.subr.mxu0 0.0
    %256 = vmatpush1.msra.mxu0 0.0
    %257 = vmatprep.subr.mxu0 0.0
    %258 = vmatpush1.msra.mxu0 0.0
    %259 = vmatprep.subr.mxu0 0.0
    %260 = vmatpush1.msra.mxu0 0.0
    %261 = vmatprep.subr.mxu0 0.0
    %262 = vmatpush1.msra.mxu0 0.0
    %263 = vmatprep.subr.mxu0 0.0
    %264 = vmatpush1.msra.mxu0 0.0
    %265 = vmatprep.subr.mxu0 0.0
    %266 = vmatpush1.msra.mxu0 0.0
    %267 = vmatprep.subr.mxu0 0.0
    %268 = vmatpush1.msra.mxu0 0.0
    %269 = vmatprep.subr.mxu0 0.0
    %270 = vmatpush1.msra.mxu0 0.0
    %271 = vmatprep.subr.mxu0 0.0
    %272 = vmatpush1.msra.mxu0 0.0
    %273 = vmatprep.subr.mxu0 0.0
    %274 = vmatpush1.msra.mxu0 0.0
    %275 = vmatprep.subr.mxu0 0.0
    %276 = vmatpush1.msra.mxu0 0.0
    %277 = vmatprep.subr.mxu0 0.0
    %278 = vmatpush1.msra.mxu0 0.0
    %279 = vmatprep.subr.mxu0 0.0
    %280 = vmatpush1.msra.mxu0 0.0
    %281 = vmatprep.mubr.f32.mxu0 0.0
    %282 = vmatmul.mubr.f32.gmra.mrb[0].mxu0 %v95
    %v283 = vpop.f32.mrb[0].mxu0
    %v284 = vadd.f32 0.0, %v283
    %v285 = vpop.f32.mrb[0].mxu0
    %286 = vmatprep.mubr.f32.mxu0 0.0
    %287 = vmatmul.mubr.f32.gmra.mrb[0].mxu0 %v96
    %v288 = vpop.f32.mrb[0].mxu0
    %v289 = vadd.f32 0.0, %v288
    %v290 = vpop.f32.mrb[0].mxu0
    %291 = vmatprep.mubr.f32.mxu0 0.0
    %292 = vmatmul.mubr.f32.gmra.mrb[0].mxu0 %v97
    %v293 = vpop.f32.mrb[0].mxu0
    %v294 = vadd.f32 0.0, %v293
    %v295 = vpop.f32.mrb[0].mxu0
    %296 = vmatprep.mubr.f32.mxu0 0.0
    %297 = vmatmul.mubr.f32.gmra.mrb[0].mxu0 %v98
    %v298 = vpop.f32.mrb[0].mxu0
    %v299 = vadd.f32 0.0, %v298
    %v300 = vpop.f32.mrb[0].mxu0
    %301 = vdwg.mxu0
    %s302 = scalar_lea.vmem [#allocation7], 256
    %v303 = vld [vmem:[%s302] sm:$0xff]
    %v304 = vld [vmem:[%s302 + $0x8] sm:$0xff]
    %v305 = vld [vmem:[%s302 + $0x10] sm:$0xff]
    %v306 = vld [vmem:[%s302 + $0x18] sm:$0xff]
    %v307 = vld [vmem:[%s302 + $0x20] sm:$0xff]
    %v308 = vld [vmem:[%s302 + $0x28] sm:$0xff]
    %v309 = vld [vmem:[%s302 + $0x30] sm:$0xff]
    %v310 = vld [vmem:[%s302 + $0x38] sm:$0xff]
    %v311 = vld [vmem:[%s302 + $0x40] sm:$0xff]
    %v312 = vld [vmem:[%s302 + $0x48] sm:$0xff]
    %v313 = vld [vmem:[%s302 + $0x50] sm:$0xff]
    %v314 = vld [vmem:[%s302 + $0x58] sm:$0xff]
    %v315 = vld [vmem:[%s302 + $0x60] sm:$0xff]
    %v316 = vld [vmem:[%s302 + $0x68] sm:$0xff]
    %v317 = vld [vmem:[%s302 + $0x70] sm:$0xff]
    %v318 = vld [vmem:[%s302 + $0x78] sm:$0xff]
    %319 = vmatprep.subr.mxu0 0.0
    %320 = vmatpush1.msra.mxu0 %v303
    %321 = vmatprep.subr.mxu0 0.0
    %322 = vmatpush1.msra.mxu0 %v304
    %323 = vmatprep.subr.mxu0 0.0
    %324 = vmatpush1.msra.mxu0 %v305
    %325 = vmatprep.subr.mxu0 0.0
    %326 = vmatpush1.msra.mxu0 %v306
    %327 = vmatprep.subr.mxu0 0.0
    %328 = vmatpush1.msra.mxu0 %v307
    %329 = vmatprep.subr.mxu0 0.0
    %330 = vmatpush1.msra.mxu0 %v308
    %331 = vmatprep.subr.mxu0 0.0
    %332 = vmatpush1.msra.mxu0 %v309
    %333 = vmatprep.subr.mxu0 0.0
    %334 = vmatpush1.msra.mxu0 %v310
    %335 = vmatprep.subr.mxu0 0.0
    %336 = vmatpush1.msra.mxu0 %v311
    %337 = vmatprep.subr.mxu0 0.0
    %338 = vmatpush1.msra.mxu0 %v312
    %339 = vmatprep.subr.mxu0 0.0
    %340 = vmatpush1.msra.mxu0 %v313
    %341 = vmatprep.subr.mxu0 0.0
    %342 = vmatpush1.msra.mxu0 %v314
    %343 = vmatprep.subr.mxu0 0.0
    %344 = vmatpush1.msra.mxu0 %v315
    %345 = vmatprep.subr.mxu0 0.0
    %346 = vmatpush1.msra.mxu0 %v316
    %347 = vmatprep.subr.mxu0 0.0
    %348 = vmatpush1.msra.mxu0 %v317
    %349 = vmatprep.subr.mxu0 0.0
    %350 = vmatpush1.msra.mxu0 %v318
    %351 = vmatprep.subr.mxu0 0.0
    %352 = vmatpush1.msra.mxu0 0.0
    %353 = vmatprep.subr.mxu0 0.0
    %354 = vmatpush1.msra.mxu0 0.0
    %355 = vmatprep.subr.mxu0 0.0
    %356 = vmatpush1.msra.mxu0 0.0
    %357 = vmatprep.subr.mxu0 0.0
    %358 = vmatpush1.msra.mxu0 0.0
    %359 = vmatprep.subr.mxu0 0.0
    %360 = vmatpush1.msra.mxu0 0.0
    %361 = vmatprep.subr.mxu0 0.0
    %362 = vmatpush1.msra.mxu0 0.0
    %363 = vmatprep.subr.mxu0 0.0
    %364 = vmatpush1.msra.mxu0 0.0
    %365 = vmatprep.subr.mxu0 0.0
    %366 = vmatpush1.msra.mxu0 0.0
    %367 = vmatprep.subr.mxu0 0.0
    %368 = vmatpush1.msra.mxu0 0.0
    %369 = vmatprep.subr.mxu0 0.0
    %370 = vmatpush1.msra.mxu0 0.0
    %371 = vmatprep.subr.mxu0 0.0
    %372 = vmatpush1.msra.mxu0 0.0
    %373 = vmatprep.subr.mxu0 0.0
    %374 = vmatpush1.msra.mxu0 0.0
    %375 = vmatprep.subr.mxu0 0.0
    %376 = vmatpush1.msra.mxu0 0.0
    %377 = vmatprep.subr.mxu0 0.0
    %378 = vmatpush1.msra.mxu0 0.0
    %379 = vmatprep.subr.mxu0 0.0
    %380 = vmatpush1.msra.mxu0 0.0
    %381 = vmatprep.subr.mxu0 0.0
    %382 = vmatpush1.msra.mxu0 0.0
    %383 = vmatprep.mubr.f32.mxu0 0.0
    %384 = vmatmul.mubr.f32.gmra.mrb[0].mxu0 %v95
    %v385 = vpop.f32.mrb[0].mxu0
    %v386 = vadd.f32 0.0, %v385
    %v387 = vpop.f32.mrb[0].mxu0
    %388 = vmatprep.mubr.f32.mxu0 0.0
    %389 = vmatmul.mubr.f32.gmra.mrb[0].mxu0 %v96
    %v390 = vpop.f32.mrb[0].mxu0
    %v391 = vadd.f32 0.0, %v390
    %v392 = vpop.f32.mrb[0].mxu0
    %393 = vmatprep.mubr.f32.mxu0 0.0
    %394 = vmatmul.mubr.f32.gmra.mrb[0].mxu0 %v97
    %v395 = vpop.f32.mrb[0].mxu0
    %v396 = vadd.f32 0.0, %v395
    %v397 = vpop.f32.mrb[0].mxu0
    %398 = vmatprep.mubr.f32.mxu0 0.0
    %399 = vmatmul.mubr.f32.gmra.mrb[0].mxu0 %v98
    %v400 = vpop.f32.mrb[0].mxu0
    %v401 = vadd.f32 0.0, %v400
    %v402 = vpop.f32.mrb[0].mxu0
    %403 = vdwg.mxu0
    %v404 = vld [vmem:[#allocation5] sm:$0xff]
    %v405 = vld [vmem:[#allocation5 + $0x8] sm:$0xff]
    %v406 = vld [vmem:[#allocation5 + $0x10] sm:$0xff]
    %v407 = vld [vmem:[#allocation5 + $0x18] sm:$0xff]
    %v408 = vld [vmem:[%s3] sm:$0x1]
    %v410 = vlaneseq
    %v411 = vshrl.u32 %v410, 7
    %v412 = vsub.s32 0, %v411
    %v413 = vrot.slane %v408, %v412
    %vm415 = vcmask 785408
    %v417 = vsel %vm415, %v404, 0
    %v420 = vsel %vm415, %v405, 0
    %v423 = vsel %vm415, %v406, 0
    %v426 = vsel %vm415, %v407, 0
    %428 = vmatprep.subr.mxu0 0.0
    %429 = vmatpush1.msra.mxu0 %v182
    %430 = vmatprep.subr.mxu0 0.0
    %431 = vmatpush1.msra.mxu0 %v187
    %432 = vmatprep.subr.mxu0 0.0
    %433 = vmatpush1.msra.mxu0 %v192
    %434 = vmatprep.subr.mxu0 0.0
    %435 = vmatpush1.msra.mxu0 %v197
    %436 = vmatprep.subr.mxu0 0.0
    %437 = vmatpush1.msra.mxu0 %v284
    %438 = vmatprep.subr.mxu0 0.0
    %439 = vmatpush1.msra.mxu0 %v289
    %440 = vmatprep.subr.mxu0 0.0
    %441 = vmatpush1.msra.mxu0 %v294
    %442 = vmatprep.subr.mxu0 0.0
    %443 = vmatpush1.msra.mxu0 %v299
    %444 = vmatprep.subr.mxu0 0.0
    %445 = vmatpush1.msra.mxu0 %v386
    %446 = vmatprep.subr.mxu0 0.0
    %447 = vmatpush1.msra.mxu0 %v391
    %448 = vmatprep.subr.mxu0 0.0
    %449 = vmatpush1.msra.mxu0 %v396
    %450 = vmatprep.subr.mxu0 0.0
    %451 = vmatpush1.msra.mxu0 %v401
    %452 = vmatprep.subr.mxu0 0.0
    %453 = vmatpush1.msra.mxu0 0.0
    %454 = vmatprep.subr.mxu0 0.0
    %455 = vmatpush1.msra.mxu0 0.0
    %456 = vmatprep.subr.mxu0 0.0
    %457 = vmatpush1.msra.mxu0 0.0
    %458 = vmatprep.subr.mxu0 0.0
    %459 = vmatpush1.msra.mxu0 0.0
    %460 = vmatprep.subr.mxu0 0.0
    %461 = vmatpush1.msra.mxu0 0.0
    %462 = vmatprep.subr.mxu0 0.0
    %463 = vmatpush1.msra.mxu0 0.0
    %464 = vmatprep.subr.mxu0 0.0
    %465 = vmatpush1.msra.mxu0 0.0
    %466 = vmatprep.subr.mxu0 0.0
    %467 = vmatpush1.msra.mxu0 0.0
    %468 = vmatprep.subr.mxu0 0.0
    %469 = vmatpush1.msra.mxu0 0.0
    %470 = vmatprep.subr.mxu0 0.0
    %471 = vmatpush1.msra.mxu0 0.0
    %472 = vmatprep.subr.mxu0 0.0
    %473 = vmatpush1.msra.mxu0 0.0
    %474 = vmatprep.subr.mxu0 0.0
    %475 = vmatpush1.msra.mxu0 0.0
    %476 = vmatprep.subr.mxu0 0.0
    %477 = vmatpush1.msra.mxu0 0.0
    %478 = vmatprep.subr.mxu0 0.0
    %479 = vmatpush1.msra.mxu0 0.0
    %480 = vmatprep.subr.mxu0 0.0
    %481 = vmatpush1.msra.mxu0 0.0
    %482 = vmatprep.subr.mxu0 0.0
    %483 = vmatpush1.msra.mxu0 0.0
    %484 = vmatprep.subr.mxu0 0.0
    %485 = vmatpush1.msra.mxu0 0.0
    %486 = vmatprep.subr.mxu0 0.0
    %487 = vmatpush1.msra.mxu0 0.0
    %488 = vmatprep.subr.mxu0 0.0
    %489 = vmatpush1.msra.mxu0 0.0
    %490 = vmatprep.subr.mxu0 0.0
    %491 = vmatpush1.msra.mxu0 0.0
    %492 = vmatprep.mubr.f32.mxu0 0.0
    %493 = vmatmul.mubr.f32.gmra.mrb[0].mxu0 %v417
    %v494 = vpop.f32.mrb[0].mxu0
    %v495 = vadd.f32 %v413, %v494
    %v496 = vpop.f32.mrb[0].mxu0
    %497 = vmatprep.mubr.f32.mxu0 0.0
    %498 = vmatmul.mubr.f32.gmra.mrb[0].mxu0 %v420
    %v499 = vpop.f32.mrb[0].mxu0
    %v500 = vadd.f32 %v413, %v499
    %v501 = vpop.f32.mrb[0].mxu0
    %502 = vmatprep.mubr.f32.mxu0 0.0
    %503 = vmatmul.mubr.f32.gmra.mrb[0].mxu0 %v423
    %v504 = vpop.f32.mrb[0].mxu0
    %v505 = vadd.f32 %v413, %v504
    %v506 = vpop.f32.mrb[0].mxu0
    %507 = vmatprep.mubr.f32.mxu0 0.0
    %508 = vmatmul.mubr.f32.gmra.mrb[0].mxu0 %v426
    %v509 = vpop.f32.mrb[0].mxu0
    %v510 = vadd.f32 %v413, %v509
    %v511 = vpop.f32.mrb[0].mxu0
    %512 = vdwg.mxu0
    %v513 = vmax.f32 %v495, 0.0
    %v514 = vmax.f32 %v500, 0.0
    %v515 = vmax.f32 %v505, 0.0
    %v516 = vmax.f32 %v510, 0.0
    %v517 = vld [vmem:[#allocation10] sm:$0xff]
    %v518 = vld [vmem:[#allocation10 + $0x8] sm:$0xff]
    %v519 = vld [vmem:[#allocation10 + $0x10] sm:$0xff]
    %v520 = vld [vmem:[#allocation10 + $0x18] sm:$0xff]
    %v521 = vld [vmem:[#allocation10 + $0x20] sm:$0xff]
    %v522 = vld [vmem:[#allocation10 + $0x28] sm:$0xff]
    %v523 = vld [vmem:[#allocation10 + $0x30] sm:$0xff]
    %v524 = vld [vmem:[#allocation10 + $0x38] sm:$0xff]
    %v525 = vld [vmem:[#allocation10 + $0x40] sm:$0xff]
    %v526 = vld [vmem:[#allocation10 + $0x48] sm:$0xff]
    %v527 = vld [vmem:[#allocation10 + $0x50] sm:$0xff]
    %v528 = vld [vmem:[#allocation10 + $0x58] sm:$0xff]
    %v529 = vld [vmem:[#allocation10 + $0x60] sm:$0xff]
    %v530 = vld [vmem:[#allocation10 + $0x68] sm:$0xff]
    %v531 = vld [vmem:[#allocation10 + $0x70] sm:$0xff]
    %v532 = vld [vmem:[#allocation10 + $0x78] sm:$0xff]
    %533 = vmatprep.subr.mxu0 0.0
    %534 = vmatpush1.msra.mxu0 %v517
    %535 = vmatprep.subr.mxu0 0.0
    %536 = vmatpush1.msra.mxu0 %v518
    %537 = vmatprep.subr.mxu0 0.0
    %538 = vmatpush1.msra.mxu0 %v519
    %539 = vmatprep.subr.mxu0 0.0
    %540 = vmatpush1.msra.mxu0 %v520
    %541 = vmatprep.subr.mxu0 0.0
    %542 = vmatpush1.msra.mxu0 %v521
    %543 = vmatprep.subr.mxu0 0.0
    %544 = vmatpush1.msra.mxu0 %v522
    %545 = vmatprep.subr.mxu0 0.0
    %546 = vmatpush1.msra.mxu0 %v523
    %547 = vmatprep.subr.mxu0 0.0
    %548 = vmatpush1.msra.mxu0 %v524
    %549 = vmatprep.subr.mxu0 0.0
    %550 = vmatpush1.msra.mxu0 %v525
    %551 = vmatprep.subr.mxu0 0.0
    %552 = vmatpush1.msra.mxu0 %v526
    %553 = vmatprep.subr.mxu0 0.0
    %554 = vmatpush1.msra.mxu0 %v527
    %555 = vmatprep.subr.mxu0 0.0
    %556 = vmatpush1.msra.mxu0 %v528
    %557 = vmatprep.subr.mxu0 0.0
    %558 = vmatpush1.msra.mxu0 %v529
    %559 = vmatprep.subr.mxu0 0.0
    %560 = vmatpush1.msra.mxu0 %v530
    %561 = vmatprep.subr.mxu0 0.0
    %562 = vmatpush1.msra.mxu0 %v531
    %563 = vmatprep.subr.mxu0 0.0
    %564 = vmatpush1.msra.mxu0 %v532
    %565 = vmatprep.subr.mxu0 0.0
    %566 = vmatpush1.msra.mxu0 0.0
    %567 = vmatprep.subr.mxu0 0.0
    %568 = vmatpush1.msra.mxu0 0.0
    %569 = vmatprep.subr.mxu0 0.0
    %570 = vmatpush1.msra.mxu0 0.0
    %571 = vmatprep.subr.mxu0 0.0
    %572 = vmatpush1.msra.mxu0 0.0
    %573 = vmatprep.subr.mxu0 0.0
    %574 = vmatpush1.msra.mxu0 0.0
    %575 = vmatprep.subr.mxu0 0.0
    %576 = vmatpush1.msra.mxu0 0.0
    %577 = vmatprep.subr.mxu0 0.0
    %578 = vmatpush1.msra.mxu0 0.0
    %579 = vmatprep.subr.mxu0 0.0
    %580 = vmatpush1.msra.mxu0 0.0
    %581 = vmatprep.subr.mxu0 0.0
    %582 = vmatpush1.msra.mxu0 0.0
    %583 = vmatprep.subr.mxu0 0.0
    %584 = vmatpush1.msra.mxu0 0.0
    %585 = vmatprep.subr.mxu0 0.0
    %586 = vmatpush1.msra.mxu0 0.0
    %587 = vmatprep.subr.mxu0 0.0
    %588 = vmatpush1.msra.mxu0 0.0
    %589 = vmatprep.subr.mxu0 0.0
    %590 = vmatpush1.msra.mxu0 0.0
    %591 = vmatprep.subr.mxu0 0.0
    %592 = vmatpush1.msra.mxu0 0.0
    %593 = vmatprep.subr.mxu0 0.0
    %594 = vmatpush1.msra.mxu0 0.0
    %595 = vmatprep.subr.mxu0 0.0
    %596 = vmatpush1.msra.mxu0 0.0
    %597 = vmatprep.mubr.f32.mxu0 0.0
    %598 = vmatmul.mubr.f32.gmra.mrb[0].mxu0 %v513
    %v599 = vpop.f32.mrb[0].mxu0
    %v600 = vadd.f32 0.0, %v599
    %v601 = vpop.f32.mrb[0].mxu0
    %602 = vmatprep.mubr.f32.mxu0 0.0
    %603 = vmatmul.mubr.f32.gmra.mrb[0].mxu0 %v514
    %v604 = vpop.f32.mrb[0].mxu0
    %v605 = vadd.f32 0.0, %v604
    %v606 = vpop.f32.mrb[0].mxu0
    %607 = vmatprep.mubr.f32.mxu0 0.0
    %608 = vmatmul.mubr.f32.gmra.mrb[0].mxu0 %v515
    %v609 = vpop.f32.mrb[0].mxu0
    %v610 = vadd.f32 0.0, %v609
    %v611 = vpop.f32.mrb[0].mxu0
    %612 = vmatprep.mubr.f32.mxu0 0.0
    %613 = vmatmul.mubr.f32.gmra.mrb[0].mxu0 %v516
    %v614 = vpop.f32.mrb[0].mxu0
    %v615 = vadd.f32 0.0, %v614
    %v616 = vpop.f32.mrb[0].mxu0
    %617 = vdwg.mxu0
    %s618 = scalar_lea.vmem [#allocation10], 128
    %v619 = vld [vmem:[%s618] sm:$0xff]
    %v620 = vld [vmem:[%s618 + $0x8] sm:$0xff]
    %v621 = vld [vmem:[%s618 + $0x10] sm:$0xff]
    %v622 = vld [vmem:[%s618 + $0x18] sm:$0xff]
    %v623 = vld [vmem:[%s618 + $0x20] sm:$0xff]
    %v624 = vld [vmem:[%s618 + $0x28] sm:$0xff]
    %v625 = vld [vmem:[%s618 + $0x30] sm:$0xff]
    %v626 = vld [vmem:[%s618 + $0x38] sm:$0xff]
    %v627 = vld [vmem:[%s618 + $0x40] sm:$0xff]
    %v628 = vld [vmem:[%s618 + $0x48] sm:$0xff]
    %v629 = vld [vmem:[%s618 + $0x50] sm:$0xff]
    %v630 = vld [vmem:[%s618 + $0x58] sm:$0xff]
    %v631 = vld [vmem:[%s618 + $0x60] sm:$0xff]
    %v632 = vld [vmem:[%s618 + $0x68] sm:$0xff]
    %v633 = vld [vmem:[%s618 + $0x70] sm:$0xff]
    %v634 = vld [vmem:[%s618 + $0x78] sm:$0xff]
    %635 = vmatprep.subr.mxu0 0.0
    %636 = vmatpush1.msra.mxu0 %v619
    %637 = vmatprep.subr.mxu0 0.0
    %638 = vmatpush1.msra.mxu0 %v620
    %639 = vmatprep.subr.mxu0 0.0
    %640 = vmatpush1.msra.mxu0 %v621
    %641 = vmatprep.subr.mxu0 0.0
    %642 = vmatpush1.msra.mxu0 %v622
    %643 = vmatprep.subr.mxu0 0.0
    %644 = vmatpush1.msra.mxu0 %v623
    %645 = vmatprep.subr.mxu0 0.0
    %646 = vmatpush1.msra.mxu0 %v624
    %647 = vmatprep.subr.mxu0 0.0
    %648 = vmatpush1.msra.mxu0 %v625
    %649 = vmatprep.subr.mxu0 0.0
    %650 = vmatpush1.msra.mxu0 %v626
    %651 = vmatprep.subr.mxu0 0.0
    %652 = vmatpush1.msra.mxu0 %v627
    %653 = vmatprep.subr.mxu0 0.0
    %654 = vmatpush1.msra.mxu0 %v628
    %655 = vmatprep.subr.mxu0 0.0
    %656 = vmatpush1.msra.mxu0 %v629
    %657 = vmatprep.subr.mxu0 0.0
    %658 = vmatpush1.msra.mxu0 %v630
    %659 = vmatprep.subr.mxu0 0.0
    %660 = vmatpush1.msra.mxu0 %v631
    %661 = vmatprep.subr.mxu0 0.0
    %662 = vmatpush1.msra.mxu0 %v632
    %663 = vmatprep.subr.mxu0 0.0
    %664 = vmatpush1.msra.mxu0 %v633
    %665 = vmatprep.subr.mxu0 0.0
    %666 = vmatpush1.msra.mxu0 %v634
    %667 = vmatprep.subr.mxu0 0.0
    %668 = vmatpush1.msra.mxu0 0.0
    %669 = vmatprep.subr.mxu0 0.0
    %670 = vmatpush1.msra.mxu0 0.0
    %671 = vmatprep.subr.mxu0 0.0
    %672 = vmatpush1.msra.mxu0 0.0
    %673 = vmatprep.subr.mxu0 0.0
    %674 = vmatpush1.msra.mxu0 0.0
    %675 = vmatprep.subr.mxu0 0.0
    %676 = vmatpush1.msra.mxu0 0.0
    %677 = vmatprep.subr.mxu0 0.0
    %678 = vmatpush1.msra.mxu0 0.0
    %679 = vmatprep.subr.mxu0 0.0
    %680 = vmatpush1.msra.mxu0 0.0
    %681 = vmatprep.subr.mxu0 0.0
    %682 = vmatpush1.msra.mxu0 0.0
    %683 = vmatprep.subr.mxu0 0.0
    %684 = vmatpush1.msra.mxu0 0.0
    %685 = vmatprep.subr.mxu0 0.0
    %686 = vmatpush1.msra.mxu0 0.0
    %687 = vmatprep.subr.mxu0 0.0
    %688 = vmatpush1.msra.mxu0 0.0
    %689 = vmatprep.subr.mxu0 0.0
    %690 = vmatpush1.msra.mxu0 0.0
    %691 = vmatprep.subr.mxu0 0.0
    %692 = vmatpush1.msra.mxu0 0.0
    %693 = vmatprep.subr.mxu0 0.0
    %694 = vmatpush1.msra.mxu0 0.0
    %695 = vmatprep.subr.mxu0 0.0
    %696 = vmatpush1.msra.mxu0 0.0
    %697 = vmatprep.subr.mxu0 0.0
    %698 = vmatpush1.msra.mxu0 0.0
    %699 = vmatprep.mubr.f32.mxu0 0.0
    %700 = vmatmul.mubr.f32.gmra.mrb[0].mxu0 %v513
    %v701 = vpop.f32.mrb[0].mxu0
    %v702 = vadd.f32 0.0, %v701
    %v703 = vpop.f32.mrb[0].mxu0
    %704 = vmatprep.mubr.f32.mxu0 0.0
    %705 = vmatmul.mubr.f32.gmra.mrb[0].mxu0 %v514
    %v706 = vpop.f32.mrb[0].mxu0
    %v707 = vadd.f32 0.0, %v706
    %v708 = vpop.f32.mrb[0].mxu0
    %709 = vmatprep.mubr.f32.mxu0 0.0
    %710 = vmatmul.mubr.f32.gmra.mrb[0].mxu0 %v515
    %v711 = vpop.f32.mrb[0].mxu0
    %v712 = vadd.f32 0.0, %v711
    %v713 = vpop.f32.mrb[0].mxu0
    %714 = vmatprep.mubr.f32.mxu0 0.0
    %715 = vmatmul.mubr.f32.gmra.mrb[0].mxu0 %v516
    %v716 = vpop.f32.mrb[0].mxu0
    %v717 = vadd.f32 0.0, %v716
    %v718 = vpop.f32.mrb[0].mxu0
    %719 = vdwg.mxu0
    %s720 = scalar_lea.vmem [#allocation10], 256
    %v721 = vld [vmem:[%s720] sm:$0xff]
    %v722 = vld [vmem:[%s720 + $0x8] sm:$0xff]
    %v723 = vld [vmem:[%s720 + $0x10] sm:$0xff]
    %v724 = vld [vmem:[%s720 + $0x18] sm:$0xff]
    %v725 = vld [vmem:[%s720 + $0x20] sm:$0xff]
    %v726 = vld [vmem:[%s720 + $0x28] sm:$0xff]
    %v727 = vld [vmem:[%s720 + $0x30] sm:$0xff]
    %v728 = vld [vmem:[%s720 + $0x38] sm:$0xff]
    %v729 = vld [vmem:[%s720 + $0x40] sm:$0xff]
    %v730 = vld [vmem:[%s720 + $0x48] sm:$0xff]
    %v731 = vld [vmem:[%s720 + $0x50] sm:$0xff]
    %v732 = vld [vmem:[%s720 + $0x58] sm:$0xff]
    %v733 = vld [vmem:[%s720 + $0x60] sm:$0xff]
    %v734 = vld [vmem:[%s720 + $0x68] sm:$0xff]
    %v735 = vld [vmem:[%s720 + $0x70] sm:$0xff]
    %v736 = vld [vmem:[%s720 + $0x78] sm:$0xff]
    %737 = vmatprep.subr.mxu0 0.0
    %738 = vmatpush1.msra.mxu0 %v721
    %739 = vmatprep.subr.mxu0 0.0
    %740 = vmatpush1.msra.mxu0 %v722
    %741 = vmatprep.subr.mxu0 0.0
    %742 = vmatpush1.msra.mxu0 %v723
    %743 = vmatprep.subr.mxu0 0.0
    %744 = vmatpush1.msra.mxu0 %v724
    %745 = vmatprep.subr.mxu0 0.0
    %746 = vmatpush1.msra.mxu0 %v725
    %747 = vmatprep.subr.mxu0 0.0
    %748 = vmatpush1.msra.mxu0 %v726
    %749 = vmatprep.subr.mxu0 0.0
    %750 = vmatpush1.msra.mxu0 %v727
    %751 = vmatprep.subr.mxu0 0.0
    %752 = vmatpush1.msra.mxu0 %v728
    %753 = vmatprep.subr.mxu0 0.0
    %754 = vmatpush1.msra.mxu0 %v729
    %755 = vmatprep.subr.mxu0 0.0
    %756 = vmatpush1.msra.mxu0 %v730
    %757 = vmatprep.subr.mxu0 0.0
    %758 = vmatpush1.msra.mxu0 %v731
    %759 = vmatprep.subr.mxu0 0.0
    %760 = vmatpush1.msra.mxu0 %v732
    %761 = vmatprep.subr.mxu0 0.0
    %762 = vmatpush1.msra.mxu0 %v733
    %763 = vmatprep.subr.mxu0 0.0
    %764 = vmatpush1.msra.mxu0 %v734
    %765 = vmatprep.subr.mxu0 0.0
    %766 = vmatpush1.msra.mxu0 %v735
    %767 = vmatprep.subr.mxu0 0.0
    %768 = vmatpush1.msra.mxu0 %v736
    %769 = vmatprep.subr.mxu0 0.0
    %770 = vmatpush1.msra.mxu0 0.0
    %771 = vmatprep.subr.mxu0 0.0
    %772 = vmatpush1.msra.mxu0 0.0
    %773 = vmatprep.subr.mxu0 0.0
    %774 = vmatpush1.msra.mxu0 0.0
    %775 = vmatprep.subr.mxu0 0.0
    %776 = vmatpush1.msra.mxu0 0.0
    %777 = vmatprep.subr.mxu0 0.0
    %778 = vmatpush1.msra.mxu0 0.0
    %779 = vmatprep.subr.mxu0 0.0
    %780 = vmatpush1.msra.mxu0 0.0
    %781 = vmatprep.subr.mxu0 0.0
    %782 = vmatpush1.msra.mxu0 0.0
    %783 = vmatprep.subr.mxu0 0.0
    %784 = vmatpush1.msra.mxu0 0.0
    %785 = vmatprep.subr.mxu0 0.0
    %786 = vmatpush1.msra.mxu0 0.0
    %787 = vmatprep.subr.mxu0 0.0
    %788 = vmatpush1.msra.mxu0 0.0
    %789 = vmatprep.subr.mxu0 0.0
    %790 = vmatpush1.msra.mxu0 0.0
    %791 = vmatprep.subr.mxu0 0.0
    %792 = vmatpush1.msra.mxu0 0.0
    %793 = vmatprep.subr.mxu0 0.0
    %794 = vmatpush1.msra.mxu0 0.0
    %795 = vmatprep.subr.mxu0 0.0
    %796 = vmatpush1.msra.mxu0 0.0
    %797 = vmatprep.subr.mxu0 0.0
    %798 = vmatpush1.msra.mxu0 0.0
    %799 = vmatprep.subr.mxu0 0.0
    %800 = vmatpush1.msra.mxu0 0.0
    %801 = vmatprep.mubr.f32.mxu0 0.0
    %802 = vmatmul.mubr.f32.gmra.mrb[0].mxu0 %v513
    %v803 = vpop.f32.mrb[0].mxu0
    %v804 = vadd.f32 0.0, %v803
    %v805 = vpop.f32.mrb[0].mxu0
    %806 = vmatprep.mubr.f32.mxu0 0.0
    %807 = vmatmul.mubr.f32.gmra.mrb[0].mxu0 %v514
    %v808 = vpop.f32.mrb[0].mxu0
    %v809 = vadd.f32 0.0, %v808
    %v810 = vpop.f32.mrb[0].mxu0
    %811 = vmatprep.mubr.f32.mxu0 0.0
    %812 = vmatmul.mubr.f32.gmra.mrb[0].mxu0 %v515
    %v813 = vpop.f32.mrb[0].mxu0
    %v814 = vadd.f32 0.0, %v813
    %v815 = vpop.f32.mrb[0].mxu0
    %816 = vmatprep.mubr.f32.mxu0 0.0
    %817 = vmatmul.mubr.f32.gmra.mrb[0].mxu0 %v516
    %v818 = vpop.f32.mrb[0].mxu0
    %v819 = vadd.f32 0.0, %v818
    %v820 = vpop.f32.mrb[0].mxu0
    %821 = vdwg.mxu0
    %v822 = vld [vmem:[#allocation8] sm:$0xff]
    %v823 = vld [vmem:[#allocation8 + $0x8] sm:$0xff]
    %v824 = vld [vmem:[#allocation8 + $0x10] sm:$0xff]
    %v825 = vld [vmem:[#allocation8 + $0x18] sm:$0xff]
    %v826 = vld [vmem:[%s6] sm:$0x1]
    %v828 = vlaneseq
    %v829 = vshrl.u32 %v828, 7
    %v830 = vsub.s32 0, %v829
    %v831 = vrot.slane %v826, %v830
    %v834 = vsel %vm415, %v822, 0
    %v837 = vsel %vm415, %v823, 0
    %v840 = vsel %vm415, %v824, 0
    %v843 = vsel %vm415, %v825, 0
    %845 = vmatprep.subr.mxu0 0.0
    %846 = vmatpush1.msra.mxu0 %v600
    %847 = vmatprep.subr.mxu0 0.0
    %848 = vmatpush1.msra.mxu0 %v605
    %849 = vmatprep.subr.mxu0 0.0
    %850 = vmatpush1.msra.mxu0 %v610
    %851 = vmatprep.subr.mxu0 0.0
    %852 = vmatpush1.msra.mxu0 %v615
    %853 = vmatprep.subr.mxu0 0.0
    %854 = vmatpush1.msra.mxu0 %v702
    %855 = vmatprep.subr.mxu0 0.0
    %856 = vmatpush1.msra.mxu0 %v707
    %857 = vmatprep.subr.mxu0 0.0
    %858 = vmatpush1.msra.mxu0 %v712
    %859 = vmatprep.subr.mxu0 0.0
    %860 = vmatpush1.msra.mxu0 %v717
    %861 = vmatprep.subr.mxu0 0.0
    %862 = vmatpush1.msra.mxu0 %v804
    %863 = vmatprep.subr.mxu0 0.0
    %864 = vmatpush1.msra.mxu0 %v809
    %865 = vmatprep.subr.mxu0 0.0
    %866 = vmatpush1.msra.mxu0 %v814
    %867 = vmatprep.subr.mxu0 0.0
    %868 = vmatpush1.msra.mxu0 %v819
    %869 = vmatprep.subr.mxu0 0.0
    %870 = vmatpush1.msra.mxu0 0.0
    %871 = vmatprep.subr.mxu0 0.0
    %872 = vmatpush1.msra.mxu0 0.0
    %873 = vmatprep.subr.mxu0 0.0
    %874 = vmatpush1.msra.mxu0 0.0
    %875 = vmatprep.subr.mxu0 0.0
    %876 = vmatpush1.msra.mxu0 0.0
    %877 = vmatprep.subr.mxu0 0.0
    %878 = vmatpush1.msra.mxu0 0.0
    %879 = vmatprep.subr.mxu0 0.0
    %880 = vmatpush1.msra.mxu0 0.0
    %881 = vmatprep.subr.mxu0 0.0
    %882 = vmatpush1.msra.mxu0 0.0
    %883 = vmatprep.subr.mxu0 0.0
    %884 = vmatpush1.msra.mxu0 0.0
    %885 = vmatprep.subr.mxu0 0.0
    %886 = vmatpush1.msra.mxu0 0.0
    %887 = vmatprep.subr.mxu0 0.0
    %888 = vmatpush1.msra.mxu0 0.0
    %889 = vmatprep.subr.mxu0 0.0
    %890 = vmatpush1.msra.mxu0 0.0
    %891 = vmatprep.subr.mxu0 0.0
    %892 = vmatpush1.msra.mxu0 0.0
    %893 = vmatprep.subr.mxu0 0.0
    %894 = vmatpush1.msra.mxu0 0.0
    %895 = vmatprep.subr.mxu0 0.0
    %896 = vmatpush1.msra.mxu0 0.0
    %897 = vmatprep.subr.mxu0 0.0
    %898 = vmatpush1.msra.mxu0 0.0
    %899 = vmatprep.subr.mxu0 0.0
    %900 = vmatpush1.msra.mxu0 0.0
    %901 = vmatprep.subr.mxu0 0.0
    %902 = vmatpush1.msra.mxu0 0.0
    %903 = vmatprep.subr.mxu0 0.0
    %904 = vmatpush1.msra.mxu0 0.0
    %905 = vmatprep.subr.mxu0 0.0
    %906 = vmatpush1.msra.mxu0 0.0
    %907 = vmatprep.subr.mxu0 0.0
    %908 = vmatpush1.msra.mxu0 0.0
    %909 = vmatprep.mubr.f32.mxu0 0.0
    %910 = vmatmul.mubr.f32.gmra.mrb[0].mxu0 %v834
    %v911 = vpop.f32.mrb[0].mxu0
    %v912 = vadd.f32 %v831, %v911
    %v913 = vpop.f32.mrb[0].mxu0
    %914 = vmatprep.mubr.f32.mxu0 0.0
    %915 = vmatmul.mubr.f32.gmra.mrb[0].mxu0 %v837
    %v916 = vpop.f32.mrb[0].mxu0
    %v917 = vadd.f32 %v831, %v916
    %v918 = vpop.f32.mrb[0].mxu0
    %919 = vmatprep.mubr.f32.mxu0 0.0
    %920 = vmatmul.mubr.f32.gmra.mrb[0].mxu0 %v840
    %v921 = vpop.f32.mrb[0].mxu0
    %v922 = vadd.f32 %v831, %v921
    %v923 = vpop.f32.mrb[0].mxu0
    %924 = vmatprep.mubr.f32.mxu0 0.0
    %925 = vmatmul.mubr.f32.gmra.mrb[0].mxu0 %v843
    %v926 = vpop.f32.mrb[0].mxu0
    %v927 = vadd.f32 %v831, %v926
    %v928 = vpop.f32.mrb[0].mxu0
    %929 = vdwg.mxu0
    %v930 = vmax.f32 %v912, 0.0
    %v931 = vmax.f32 %v917, 0.0
    %v932 = vmax.f32 %v922, 0.0
    %v933 = vmax.f32 %v927, 0.0
    %934 = vst [vmem:[#allocation11] sm:$0xff] %v930
    %935 = vst [vmem:[#allocation11 + $0x8] sm:$0xff] %v931
    %936 = vst [vmem:[#allocation11 + $0x10] sm:$0xff] %v932
    %937 = vst [vmem:[#allocation11 + $0x18] sm:$0xff] %v933
    // Predicated region
    $region50: #{tpu_custom_call.1} parent=1 // pred_check
      _
    $region51: #{tpu_custom_call.1} parent=1 // pred_check_branch
      %939 = sbr.rel (0) target = $region53
    $region52: #{tpu_custom_call.1} parent=1 // pred_region
      %s941 = ssub.s32 512, 512
      %942 = vsyncadd [#allocation4], %s941
      %s943 = sshll.u32 [#allocation11], 4
      %s944 = int_to_ptr.vmem [resolvable:$true] %s943
      %949 = dma.vmem_to_hbm [thread:$0]  %s944, 512, %s7, [#allocation4], 128, 128, 8
    $region53: #{tpu_custom_call.1} parent=1 // pred_fallthru
      _
    // Predicated region
    $region54: #{tpu_custom_call.1} parent=1 // pred_check
      _
    $region55: #{tpu_custom_call.1} parent=1 // pred_check_branch
      %951 = sbr.rel (0) target = $region57
    $region56: #{tpu_custom_call.1} parent=1 // pred_region
      %952 = dma.done [#allocation4], 512
    $region57: #{tpu_custom_call.1} parent=1 // pred_fallthru
      _
    %953 = vsyncpa [#allocation3], 1
    %954 = vsyncpa [#allocation6], 1
    %955 = vsyncpa [#allocation9], 1
    %956 = vsyncpa [#allocation4], 1

</llo_original>
